<compile_context>
chip_gen: v5e
topology: v5e:2x2
jax: 0.10.0
libtpu: 0.0.40
codegen_flags: <defaults>
</compile_context>

<pallas_src>
from functools import partial

import jax
import jax.numpy as jnp
from jax import lax
from jax.experimental import pallas as pl
from jax.experimental.pallas import tpu as pltpu


# --------------------------------------------------------------------------
# Fused kernel body: conv3x3 (pad=1) + folded BN + LeakyReLU, one batch elem.
# --------------------------------------------------------------------------
def _convblock_kernel(x_ref, w_ref, b_ref, o_ref, *, Wp, n_out, neg_slope):
    """x_ref: (1, Cin, Hp*Wp) flattened padded input (lane-dense spatial)
       w_ref: (9, Cout, Cin)  per-tap channel-mixing matrices (BN folded in)
       b_ref: (Cout, 1)       folded bias
       o_ref: (1, Cout, n_out) lane-dense output slab, n_out = H*Wp
    """
    x = x_ref[0]                                   # (Cin, Hp*Wp)
    cout = o_ref.shape[1]
    acc = jnp.zeros((cout, n_out), jnp.float32)
    # 9 taps: each is a contiguous shifted slice of the flattened padded
    # spatial axis -> (Cout, Cin) @ (Cin, H*Wp) MXU matmul, no reshape copies.
    for ky in range(3):
        for kx in range(3):
            s = ky * Wp + kx                       # static shift
            slab = x[:, s:s + n_out]               # (Cin, n_out)
            acc = acc + jnp.dot(w_ref[ky * 3 + kx], slab,
                                preferred_element_type=jnp.float32)
    acc = acc + b_ref[...]                         # (Cout, 1) broadcast on lanes
    o_ref[0] = jnp.where(acc >= 0, acc, neg_slope * acc)   # LeakyReLU(0.1)


# --------------------------------------------------------------------------
# Wrapper: NCHW interface, BN folding, lane-dense re-layout.
# --------------------------------------------------------------------------
def convblock_keb(x_nchw, params, *, eps=1e-5, negative_slope=0.1):
    B, Cin, H, W = x_nchw.shape
    w = params["w"]                                 # (Cout, Cin, 3, 3) (PyTorch OIHW)
    Cout = w.shape[0]

    # Fold BatchNorm (running stats) into the conv weights/bias.
    scale = params["gamma"] * lax.rsqrt(params["var"] + eps)          # (Cout,)
    w_f = w * scale[:, None, None, None]
    b_f = (params["b"] - params["mean"]) * scale + params["beta"]     # (Cout,)
    # Per-tap (Cout, Cin) matrices, tap index t = ky*3 + kx.
    w_taps = jnp.transpose(w_f, (2, 3, 0, 1)).reshape(9, Cout, Cin)

    # Pad once (1 top / 2 bottom rows, 1 left / 1 right col) and flatten the
    # spatial axes so every conv tap is a contiguous slice of the lane axis.
    Hp, Wp = H + 3, W + 2
    xflat = jnp.pad(x_nchw, ((0, 0), (0, 0), (1, 2), (1, 1))).reshape(
        B, Cin, Hp * Wp)
    n_out = H * Wp

    kern = partial(_convblock_kernel, Wp=Wp, n_out=n_out,
                   neg_slope=negative_slope)
    out_flat = pl.pallas_call(
        kern,
        out_shape=jax.ShapeDtypeStruct((B, Cout, n_out), jnp.float32),
        grid=(B,),
        in_specs=[
            pl.BlockSpec((1, Cin, Hp * Wp), lambda b: (b, 0, 0)),
            pl.BlockSpec((9, Cout, Cin), lambda b: (0, 0, 0)),   # resident
            pl.BlockSpec((Cout, 1), lambda b: (0, 0)),            # resident
        ],
        out_specs=pl.BlockSpec((1, Cout, n_out), lambda b: (b, 0, 0)),
        compiler_params=pltpu.CompilerParams(
            dimension_semantics=("parallel",)),
    )(xflat, w_taps, b_f.reshape(Cout, 1))

    # Lane-dense slab -> NCHW (drop the 2 padded columns per spatial row).
    return out_flat.reshape(B, Cout, H, Wp)[:, :, :, :W]


# --------------------------------------------------------------------------
# Pure-JAX reference (conv + eval-mode BN + LeakyReLU) for correctness check.
# --------------------------------------------------------------------------
def convblock_ref(x, params, *, eps=1e-5, negative_slope=0.1):
    y = lax.conv_general_dilated(
        x, params["w"], window_strides=(1, 1), padding=[(1, 1), (1, 1)],
        dimension_numbers=("NCHW", "OIHW", "NCHW"))
    y = y + params["b"][None, :, None, None]
    scale = params["gamma"] / jnp.sqrt(params["var"] + eps)
    y = ((y - params["mean"][None, :, None, None])
         * scale[None, :, None, None]
         + params["beta"][None, :, None, None])
    return jnp.where(y >= 0, y, negative_slope * y)


# --------------------------------------------------------------------------
if __name__ == "__main__":
    B, Cin, Cout, H, W = 2, 4, 4, 16, 16

    key = jax.random.PRNGKey(0)
    kx, kw, kb, kg, kbe, km, kv = jax.random.split(key, 7)

    x = jax.random.normal(kx, (B, Cin, H, W), jnp.float32)          # NCHW input

    params = {
        "w":     jax.random.normal(kw, (Cout, Cin, 3, 3), jnp.float32) * 0.2,
        "b":     jax.random.normal(kb, (Cout,), jnp.float32) * 0.1,
        "gamma": 1.0 + 0.1 * jax.random.normal(kg, (Cout,), jnp.float32),
        "beta":  0.1 * jax.random.normal(kbe, (Cout,), jnp.float32),
        "mean":  0.1 * jax.random.normal(km, (Cout,), jnp.float32),
        "var":   0.5 + jax.random.uniform(kv, (Cout,), jnp.float32),  # > 0
    }

    out = jax.block_until_ready(convblock_keb(x, params))
    ref = jax.block_until_ready(convblock_ref(x, params))

    assert out.shape == (B, Cout, H, W), out.shape
    max_err = float(jnp.max(jnp.abs(out - ref)))
    assert jnp.allclose(out, ref, atol=1e-4, rtol=1e-4), max_err

    print("KERNEL_OK")
</pallas_src>

<mosaic_0001>
module attributes {stable_mosaic.version = 11 : i64} {
  func.func @_convblock_kernel(%arg0: i32, %arg1: memref<1x4x342xf32, #tpu.memory_space<vmem>>, %arg2: memref<9x4x4xf32, #tpu.memory_space<vmem>>, %arg3: memref<4x1xf32, #tpu.memory_space<vmem>>, %arg4: memref<1x4x288xf32, #tpu.memory_space<vmem>>) attributes {dimension_semantics = [#tpu.dimension_semantics<parallel>], iteration_bounds = array<i64: 2>, scalar_prefetch = 0 : i64, scratch_operands = 0 : i64, tpu.core_type = #tpu.core_type<tc>, window_params = [{transform_indices = @transform_0, window_bounds = array<i64: 1, 4, 342>}, {pipeline_mode = #tpu.pipeline_mode<synchronous>, transform_indices = @transform_1, window_bounds = array<i64: 9, 4, 4>}, {pipeline_mode = #tpu.pipeline_mode<synchronous>, transform_indices = @transform_2, window_bounds = array<i64: 4, 1>}, {transform_indices = @transform_3, window_bounds = array<i64: 1, 4, 288>}]} {
    %c0 = arith.constant 0 : index
    %c0_0 = arith.constant 0 : index
    %c0_1 = arith.constant 0 : index
    %0 = vector.load %arg1[%c0, %c0_0, %c0_1] : memref<1x4x342xf32, #tpu.memory_space<vmem>>, vector<1x4x342xf32>
    %1 = vector.shape_cast %0 : vector<1x4x342xf32> to vector<4x342xf32>
    %cst = arith.constant 0.000000e+00 : f32
    %2 = vector.broadcast %cst : f32 to vector<4x288xf32>
    %3 = vector.extract_strided_slice %1 {offsets = [0, 0], sizes = [4, 288], strides = [1, 1]} : vector<4x342xf32> to vector<4x288xf32>
    %c0_2 = arith.constant 0 : index
    %c0_3 = arith.constant 0 : index
    %c0_4 = arith.constant 0 : index
    %4 = vector.load %arg2[%c0_2, %c0_3, %c0_4] : memref<9x4x4xf32, #tpu.memory_space<vmem>>, vector<1x4x4xf32>
    %5 = vector.shape_cast %4 : vector<1x4x4xf32> to vector<4x4xf32>
    %cst_5 = arith.constant dense<0.000000e+00> : vector<4x288xf32>
    %6 = tpu.matmul %5, %3, %cst_5 {dimension_numbers = #tpu.dot_dimension_numbers<[1], [0], [0], [1], [0, 0, 1, 1], [], []>} : vector<4x4xf32>, vector<4x288xf32>, vector<4x288xf32> -> vector<4x288xf32>
    %7 = arith.addf %2, %6 : vector<4x288xf32>
    %8 = vector.extract_strided_slice %1 {offsets = [0, 1], sizes = [4, 288], strides = [1, 1]} : vector<4x342xf32> to vector<4x288xf32>
    %c1 = arith.constant 1 : index
    %c0_6 = arith.constant 0 : index
    %c0_7 = arith.constant 0 : index
    %9 = vector.load %arg2[%c1, %c0_6, %c0_7] : memref<9x4x4xf32, #tpu.memory_space<vmem>>, vector<1x4x4xf32>
    %10 = vector.shape_cast %9 : vector<1x4x4xf32> to vector<4x4xf32>
    %cst_8 = arith.constant dense<0.000000e+00> : vector<4x288xf32>
    %11 = tpu.matmul %10, %8, %cst_8 {dimension_numbers = #tpu.dot_dimension_numbers<[1], [0], [0], [1], [0, 0, 1, 1], [], []>} : vector<4x4xf32>, vector<4x288xf32>, vector<4x288xf32> -> vector<4x288xf32>
    %12 = arith.addf %7, %11 : vector<4x288xf32>
    %13 = vector.extract_strided_slice %1 {offsets = [0, 2], sizes = [4, 288], strides = [1, 1]} : vector<4x342xf32> to vector<4x288xf32>
    %c2 = arith.constant 2 : index
    %c0_9 = arith.constant 0 : index
    %c0_10 = arith.constant 0 : index
    %14 = vector.load %arg2[%c2, %c0_9, %c0_10] : memref<9x4x4xf32, #tpu.memory_space<vmem>>, vector<1x4x4xf32>
    %15 = vector.shape_cast %14 : vector<1x4x4xf32> to vector<4x4xf32>
    %cst_11 = arith.constant dense<0.000000e+00> : vector<4x288xf32>
    %16 = tpu.matmul %15, %13, %cst_11 {dimension_numbers = #tpu.dot_dimension_numbers<[1], [0], [0], [1], [0, 0, 1, 1], [], []>} : vector<4x4xf32>, vector<4x288xf32>, vector<4x288xf32> -> vector<4x288xf32>
    %17 = arith.addf %12, %16 : vector<4x288xf32>
    %18 = vector.extract_strided_slice %1 {offsets = [0, 18], sizes = [4, 288], strides = [1, 1]} : vector<4x342xf32> to vector<4x288xf32>
    %c3 = arith.constant 3 : index
    %c0_12 = arith.constant 0 : index
    %c0_13 = arith.constant 0 : index
    %19 = vector.load %arg2[%c3, %c0_12, %c0_13] : memref<9x4x4xf32, #tpu.memory_space<vmem>>, vector<1x4x4xf32>
    %20 = vector.shape_cast %19 : vector<1x4x4xf32> to vector<4x4xf32>
    %cst_14 = arith.constant dense<0.000000e+00> : vector<4x288xf32>
    %21 = tpu.matmul %20, %18, %cst_14 {dimension_numbers = #tpu.dot_dimension_numbers<[1], [0], [0], [1], [0, 0, 1, 1], [], []>} : vector<4x4xf32>, vector<4x288xf32>, vector<4x288xf32> -> vector<4x288xf32>
    %22 = arith.addf %17, %21 : vector<4x288xf32>
    %23 = vector.extract_strided_slice %1 {offsets = [0, 19], sizes = [4, 288], strides = [1, 1]} : vector<4x342xf32> to vector<4x288xf32>
    %c4 = arith.constant 4 : index
    %c0_15 = arith.constant 0 : index
    %c0_16 = arith.constant 0 : index
    %24 = vector.load %arg2[%c4, %c0_15, %c0_16] : memref<9x4x4xf32, #tpu.memory_space<vmem>>, vector<1x4x4xf32>
    %25 = vector.shape_cast %24 : vector<1x4x4xf32> to vector<4x4xf32>
    %cst_17 = arith.constant dense<0.000000e+00> : vector<4x288xf32>
    %26 = tpu.matmul %25, %23, %cst_17 {dimension_numbers = #tpu.dot_dimension_numbers<[1], [0], [0], [1], [0, 0, 1, 1], [], []>} : vector<4x4xf32>, vector<4x288xf32>, vector<4x288xf32> -> vector<4x288xf32>
    %27 = arith.addf %22, %26 : vector<4x288xf32>
    %28 = vector.extract_strided_slice %1 {offsets = [0, 20], sizes = [4, 288], strides = [1, 1]} : vector<4x342xf32> to vector<4x288xf32>
    %c5 = arith.constant 5 : index
    %c0_18 = arith.constant 0 : index
    %c0_19 = arith.constant 0 : index
    %29 = vector.load %arg2[%c5, %c0_18, %c0_19] : memref<9x4x4xf32, #tpu.memory_space<vmem>>, vector<1x4x4xf32>
    %30 = vector.shape_cast %29 : vector<1x4x4xf32> to vector<4x4xf32>
    %cst_20 = arith.constant dense<0.000000e+00> : vector<4x288xf32>
    %31 = tpu.matmul %30, %28, %cst_20 {dimension_numbers = #tpu.dot_dimension_numbers<[1], [0], [0], [1], [0, 0, 1, 1], [], []>} : vector<4x4xf32>, vector<4x288xf32>, vector<4x288xf32> -> vector<4x288xf32>
    %32 = arith.addf %27, %31 : vector<4x288xf32>
    %33 = vector.extract_strided_slice %1 {offsets = [0, 36], sizes = [4, 288], strides = [1, 1]} : vector<4x342xf32> to vector<4x288xf32>
    %c6 = arith.constant 6 : index
    %c0_21 = arith.constant 0 : index
    %c0_22 = arith.constant 0 : index
    %34 = vector.load %arg2[%c6, %c0_21, %c0_22] : memref<9x4x4xf32, #tpu.memory_space<vmem>>, vector<1x4x4xf32>
    %35 = vector.shape_cast %34 : vector<1x4x4xf32> to vector<4x4xf32>
    %cst_23 = arith.constant dense<0.000000e+00> : vector<4x288xf32>
    %36 = tpu.matmul %35, %33, %cst_23 {dimension_numbers = #tpu.dot_dimension_numbers<[1], [0], [0], [1], [0, 0, 1, 1], [], []>} : vector<4x4xf32>, vector<4x288xf32>, vector<4x288xf32> -> vector<4x288xf32>
    %37 = arith.addf %32, %36 : vector<4x288xf32>
    %38 = vector.extract_strided_slice %1 {offsets = [0, 37], sizes = [4, 288], strides = [1, 1]} : vector<4x342xf32> to vector<4x288xf32>
    %c7 = arith.constant 7 : index
    %c0_24 = arith.constant 0 : index
    %c0_25 = arith.constant 0 : index
    %39 = vector.load %arg2[%c7, %c0_24, %c0_25] : memref<9x4x4xf32, #tpu.memory_space<vmem>>, vector<1x4x4xf32>
    %40 = vector.shape_cast %39 : vector<1x4x4xf32> to vector<4x4xf32>
    %cst_26 = arith.constant dense<0.000000e+00> : vector<4x288xf32>
    %41 = tpu.matmul %40, %38, %cst_26 {dimension_numbers = #tpu.dot_dimension_numbers<[1], [0], [0], [1], [0, 0, 1, 1], [], []>} : vector<4x4xf32>, vector<4x288xf32>, vector<4x288xf32> -> vector<4x288xf32>
    %42 = arith.addf %37, %41 : vector<4x288xf32>
    %43 = vector.extract_strided_slice %1 {offsets = [0, 38], sizes = [4, 288], strides = [1, 1]} : vector<4x342xf32> to vector<4x288xf32>
    %c8 = arith.constant 8 : index
    %c0_27 = arith.constant 0 : index
    %c0_28 = arith.constant 0 : index
    %44 = vector.load %arg2[%c8, %c0_27, %c0_28] : memref<9x4x4xf32, #tpu.memory_space<vmem>>, vector<1x4x4xf32>
    %45 = vector.shape_cast %44 : vector<1x4x4xf32> to vector<4x4xf32>
    %cst_29 = arith.constant dense<0.000000e+00> : vector<4x288xf32>
    %46 = tpu.matmul %45, %43, %cst_29 {dimension_numbers = #tpu.dot_dimension_numbers<[1], [0], [0], [1], [0, 0, 1, 1], [], []>} : vector<4x4xf32>, vector<4x288xf32>, vector<4x288xf32> -> vector<4x288xf32>
    %47 = arith.addf %42, %46 : vector<4x288xf32>
    %c0_30 = arith.constant 0 : index
    %c0_31 = arith.constant 0 : index
    %48 = vector.load %arg3[%c0_30, %c0_31] : memref<4x1xf32, #tpu.memory_space<vmem>>, vector<4x1xf32>
    %49 = vector.broadcast %48 : vector<4x1xf32> to vector<4x288xf32>
    %50 = arith.addf %47, %49 : vector<4x288xf32>
    %cst_32 = arith.constant 0.000000e+00 : f32
    %51 = vector.broadcast %cst_32 : f32 to vector<4x288xf32>
    %52 = arith.cmpf oge, %50, %51 : vector<4x288xf32>
    %cst_33 = arith.constant 1.000000e-01 : f32
    %53 = vector.broadcast %cst_33 : f32 to vector<4x288xf32>
    %54 = arith.mulf %53, %50 : vector<4x288xf32>
    %55 = arith.select %52, %50, %54 : vector<4x288xi1>, vector<4x288xf32>
    %c0_34 = arith.constant 0 : index
    %c0_35 = arith.constant 0 : index
    %c0_36 = arith.constant 0 : index
    %56 = vector.load %arg4[%c0_34, %c0_35, %c0_36] : memref<1x4x288xf32, #tpu.memory_space<vmem>>, vector<1x4x288xf32>
    %57 = vector.shape_cast %56 : vector<1x4x288xf32> to vector<4x288xf32>
    %58 = vector.shape_cast %55 : vector<4x288xf32> to vector<1x4x288xf32>
    tpu.vector_store %arg4[%c0_34, %c0_35, %c0_36], %58 {strides = array<i32>} : memref<1x4x288xf32, #tpu.memory_space<vmem>>, vector<1x4x288xf32>,
    return
  }
  func.func @transform_0(%arg0: i32) -> (i32, i32, i32) {
    %c0_i32 = arith.constant 0 : i32
    %c0_i32_0 = arith.constant 0 : i32
    %c0_i32_1 = arith.constant 0 : i32
    return %arg0, %c0_i32, %c0_i32_0 : i32, i32, i32
  }
  func.func @transform_1(%arg0: i32) -> (i32, i32, i32) {
    %c0_i32 = arith.constant 0 : i32
    %c0_i32_0 = arith.constant 0 : i32
    %c0_i32_1 = arith.constant 0 : i32
    %c0_i32_2 = arith.constant 0 : i32
    return %c0_i32, %c0_i32_0, %c0_i32_1 : i32, i32, i32
  }
  func.func @transform_2(%arg0: i32) -> (i32, i32) {
    %c0_i32 = arith.constant 0 : i32
    %c0_i32_0 = arith.constant 0 : i32
    %c0_i32_1 = arith.constant 0 : i32
    return %c0_i32, %c0_i32_0 : i32, i32
  }
  func.func @transform_3(%arg0: i32) -> (i32, i32, i32) {
    %c0_i32 = arith.constant 0 : i32
    %c0_i32_0 = arith.constant 0 : i32
    %c0_i32_1 = arith.constant 0 : i32
    return %arg0, %c0_i32, %c0_i32_0 : i32, i32, i32
  }
}

</mosaic_0001>

<llo_original>
// kernel: tpu_custom_call.1
$region0: #{tpu_custom_call.1}
  #allocation0 [shape = 'u32[]', space=smem, size = 0x4, offset = 0x4, fixed_abs, tag = 'smem constant byte address 0x4 - core index']
  #allocation1 [shape = 'u32[72,128]{1,0:T(1,128)}', space=vmem, size = 0x9000, scoped, tag = 'internal scratch']
  %s0 = inlined_call_operand.vmem [shape: f32[2,4,342], index: 0, kind: input, shape index: {}]
  %s1 = inlined_call_operand.vmem [shape: f32[9,4,4], index: 1, kind: input, shape index: {}]
  %s2 = inlined_call_operand.vmem [shape: f32[4,1], index: 2, kind: input, shape index: {}]
  %s3 = inlined_call_operand.hbm [shape: f32[2,4,288], index: 3, kind: output, shape index: {}]
  %s4 = sld [smem:[#allocation0]]
  $region45: #{tpu_custom_call.1} parent=0
    _
  %s6 = ssub.s32 1, %s4
  %s7 = scalar_select 0, %s6, %s4
  $region1: #{tpu_custom_call.1} parent=0
    #allocation2 [shape = 'u8[12288]{0}', space=vmem, size = 0x3000, scoped, tag = 'output window, operand 0']
    #allocation3 [shape = 's32[2]{0}', space=sflag, size = 0x8, scoped, tag = 'scoped memory for tpu_custom_call.1']
    %8 = vsyncpa [#allocation3], 0
    %s9 = scalar_lea.sflag [#allocation3], 1
    %10 = vsyncpa %s9, 0
    loop: start=0, step=1, limit=4
    $region2: #{tpu_custom_call.1} parent=1 // loop_pre_header
      _
    $region3: #{tpu_custom_call.1} parent=1 // loop_header
      %s12 = sphi 0, %s16
      %p13 = scmp.ge.s32.totalorder %s12, 4
      %s22 = sphi 0, %s24
      %s25 = sphi 0, %s22
      %s26 = sphi 0, %s25
      %s42 = sphi 0, %s26
      %s46 = sphi 0, %s46
      %s48 = sphi 0, %s46
      %s49 = sphi 0, %s48
      %s63 = sphi 0, %s49
      %s67 = sphi 0, %s67
      %s69 = sphi 0, %s67
      %s70 = sphi 0, %s69
      %s84 = sphi 0, %s70
      %s90 = sphi 0, %s92
      %s93 = sphi 0, %s90
      %s94 = sphi 0, %s93
      %s110 = sphi 0, %s94
    $region4: #{tpu_custom_call.1} parent=1 // loop_header_branch
      %15 = sbr.rel (%p13) target = $region8
    $region5: #{tpu_custom_call.1} parent=1 // loop_body
      %s17 = ssub.s32 %s12, 1
      %s18 = ssub.s32 %s12, 2
      %s19 = sadd.s32 %s12, 1
      %s20 = ssub.s32 %s12, %s19
      %p21 = scmp.eq.s32.totalorder %s20, 0
      %s23 = sadd.s32 %s22, 1
      %s24 = scalar_select %p21, %s22, %s23
      %p27 = pneg %p21
      %p28 = scmp.eq.s32.totalorder %s12, 1
      %p29 = por %p27, %p28
      %p30 = scmp.ne.s32.totalorder %s22, %s25
      %p31 = scmp.eq.s32.totalorder %s12, 0
      %p32 = por %p30, %p31
      %p33 = scmp.ne.s32.totalorder %s22, %s25
      %p34 = scmp.eq.s32.totalorder %s17, 1
      %p35 = por %p33, %p34
      %p36 = scmp.ne.s32.totalorder %s25, %s26
      %p37 = scmp.eq.s32.totalorder %s17, 0
      %p38 = por %p36, %p37
      %p39 = scmp.ne.s32.totalorder %s25, %s26
      %p40 = scmp.eq.s32.totalorder %s18, 1
      %p41 = por %p39, %p40
      %p43 = scmp.ne.s32.totalorder %s26, %s42
      %p44 = scmp.eq.s32.totalorder %s18, 0
      %p45 = por %p43, %p44
      %s47 = sadd.s32 %s46, 1
      %p50 = scmp.eq.s32.totalorder %s12, 1
      %p51 = scmp.ne.s32.totalorder %s46, %s48
      %p52 = scmp.eq.s32.totalorder %s12, 0
      %p53 = por %p51, %p52
      %p54 = scmp.ne.s32.totalorder %s46, %s48
      %p55 = scmp.eq.s32.totalorder %s17, 1
      %p56 = por %p54, %p55
      %p57 = scmp.ne.s32.totalorder %s48, %s49
      %p58 = scmp.eq.s32.totalorder %s17, 0
      %p59 = por %p57, %p58
      %p60 = scmp.ne.s32.totalorder %s48, %s49
      %p61 = scmp.eq.s32.totalorder %s18, 1
      %p62 = por %p60, %p61
      %p64 = scmp.ne.s32.totalorder %s49, %s63
      %p65 = scmp.eq.s32.totalorder %s18, 0
      %p66 = por %p64, %p65
      %s68 = sadd.s32 %s67, 1
      %p71 = scmp.eq.s32.totalorder %s12, 1
      %p72 = scmp.ne.s32.totalorder %s67, %s69
      %p73 = scmp.eq.s32.totalorder %s12, 0
      %p74 = por %p72, %p73
      %p75 = scmp.ne.s32.totalorder %s67, %s69
      %p76 = scmp.eq.s32.totalorder %s17, 1
      %p77 = por %p75, %p76
      %p78 = scmp.ne.s32.totalorder %s69, %s70
      %p79 = scmp.eq.s32.totalorder %s17, 0
      %p80 = por %p78, %p79
      %p81 = scmp.ne.s32.totalorder %s69, %s70
      %p82 = scmp.eq.s32.totalorder %s18, 1
      %p83 = por %p81, %p82
      %p85 = scmp.ne.s32.totalorder %s70, %s84
      %p86 = scmp.eq.s32.totalorder %s18, 0
      %p87 = por %p85, %p86
      %s88 = ssub.s32 %s12, %s19
      %p89 = scmp.eq.s32.totalorder %s88, 0
      %s91 = sadd.s32 %s90, 1
      %s92 = scalar_select %p89, %s90, %s91
      %p95 = pneg %p89
      %p96 = scmp.eq.s32.totalorder %s12, 1
      %p97 = por %p95, %p96
      %p98 = scmp.ne.s32.totalorder %s90, %s93
      %p99 = scmp.eq.s32.totalorder %s12, 0
      %p100 = por %p98, %p99
      %p101 = scmp.ne.s32.totalorder %s90, %s93
      %p102 = scmp.eq.s32.totalorder %s17, 1
      %p103 = por %p101, %p102
      %p104 = scmp.ne.s32.totalorder %s93, %s94
      %p105 = scmp.eq.s32.totalorder %s17, 0
      %p106 = por %p104, %p105
      %p107 = scmp.ne.s32.totalorder %s93, %s94
      %p108 = scmp.eq.s32.totalorder %s18, 1
      %p109 = por %p107, %p108
      %p111 = scmp.ne.s32.totalorder %s94, %s110
      %p112 = scmp.eq.s32.totalorder %s18, 0
      %p113 = por %p111, %p112
      %p114 = scmp.le.s32.totalorder 1, %s12
      %p115 = scmp.lt.s32.totalorder %s12, 3
      %p116 = pnand %p114, %p115
      %p117 = pneg %p116
      // Predicated region
      $region9: #{tpu_custom_call.1} parent=5 // pred_check
        _
      $region10: #{tpu_custom_call.1} parent=5 // pred_check_branch
        %119 = sbr.rel (%p116) target = $region12
      $region11: #{tpu_custom_call.1} parent=5 // pred_region
        %s120 = ssub.s32 %s12, 1
        // Predicated region
        $region13: #{tpu_custom_call.1} parent=11 // pred_check
          %p121 = pneg %p59
        $region14: #{tpu_custom_call.1} parent=11 // pred_check_branch
          %123 = sbr.rel (%p121) target = $region16
        $region15: #{tpu_custom_call.1} parent=11 // pred_region
          _
        $region16: #{tpu_custom_call.1} parent=11 // pred_fallthru
          _
        // Predicated region
        $region17: #{tpu_custom_call.1} parent=11 // pred_check
          %p124 = pneg %p80
        $region18: #{tpu_custom_call.1} parent=11 // pred_check_branch
          %126 = sbr.rel (%p124) target = $region20
        $region19: #{tpu_custom_call.1} parent=11 // pred_region
          _
        $region20: #{tpu_custom_call.1} parent=11 // pred_fallthru
          _
      $region12: #{tpu_custom_call.1} parent=5 // pred_fallthru
        _
      %p127 = scmp.lt.s32.totalorder %s12, 2
      // Predicated region
      $region21: #{tpu_custom_call.1} parent=5 // pred_check
        %p128 = pneg %p127
      $region22: #{tpu_custom_call.1} parent=5 // pred_check_branch
        %130 = sbr.rel (%p128) target = $region24
      $region23: #{tpu_custom_call.1} parent=5 // pred_region
        // Predicated region
        $region25: #{tpu_custom_call.1} parent=23 // pred_check
          %p131 = pneg %p32
        $region26: #{tpu_custom_call.1} parent=23 // pred_check_branch
          %133 = sbr.rel (%p131) target = $region28
        $region27: #{tpu_custom_call.1} parent=23 // pred_region
          %p134 = scmp.lt.s32.totalorder %s12, 1
          %s135 = scalar_select %p134, %s12, 1
          %s136 = smul.addr %s135, 3
          %s137 = smul.addr %s136, 4
          %s138 = scalar_lea.vmem %s0, %s137
        $region28: #{tpu_custom_call.1} parent=23 // pred_fallthru
          _
      $region24: #{tpu_custom_call.1} parent=5 // pred_fallthru
        _
      %p139 = scmp.le.s32.totalorder 1, %s12
      %p140 = scmp.lt.s32.totalorder %s12, 3
      %p141 = pnand %p139, %p140
      %p142 = pneg %p141
      // Predicated region
      $region29: #{tpu_custom_call.1} parent=5 // pred_check
        _
      $region30: #{tpu_custom_call.1} parent=5 // pred_check_branch
        %144 = sbr.rel (%p141) target = $region32
      $region31: #{tpu_custom_call.1} parent=5 // pred_region
        %s145 = ssub.s32 %s12, 1
        %p146 = scmp.lt.s32.totalorder %s17, 1
        %s147 = scalar_select %p146, %s17, 1
        %s148 = smul.addr %s147, 3
        %s149 = smul.addr %s148, 4
        %s150 = scalar_lea.vmem %s0, %s149
        %p151 = pneg %p38
        %p152 = pneg %p35
        %p153 = pneg %p59
        %p154 = pneg %p56
        %p155 = pneg %p80
        %p156 = pneg %p77
        %p157 = pneg %p106
        %p158 = pneg %p103
        %s159 = sand.u32 %s93, 1
        %s160 = scalar_lea.sflag [#allocation3], %s159
        %s161 = sand.u32 %s93, 1
        %s162 = smul.addr %s161, 12
        %s163 = scalar_lea.vmem [#allocation2], %s162
        %p164 = scmp.lt.s32.totalorder %s17, 1
        %s165 = scalar_select %p164, %s17, 1
        %s166 = smul.addr %s165, 3
        %s167 = smul.addr %s166, 4
        %s168 = scalar_lea.vmem %s0, %s167
        %v169 = vld [vmem:[%s168] sm:$0xff]
        %v170 = vld [vmem:[%s168 + $0x8] sm:$0xf]
        %v171 = vld [vmem:[%s1] sm:$0xf]
        %s172 = scalar_lea.vmem %s1, 4
        %v173 = vld [vmem:[%s172] sm:$0xf]
        %176 = vst [vmem:[#allocation1] ss:$2 sm:$0xff] %v169
        %s177 = scalar_lea.vmem [#allocation1], 16
        %178 = vst [vmem:[%s177] ss:$2 sm:$0xff] %v170
        %v179 = vld.sshfl [vmem:[#allocation1] sm:$0xff pattern:$0x75316420]
        %v180 = vld.sshfl [vmem:[#allocation1 + $0x8] sm:$0xff pattern:$0x75316420]
        %v181 = vld.sshfl [vmem:[#allocation1 + $0x10] sm:$0xff pattern:$0x75316420]
        %182 = vrot.lane.b32.xlu0 %v179, 127
        %v183 = vpop.permute.xlu0 %182
        %184 = vrot.lane.b32.xlu0 %v180, 127
        %v185 = vpop.permute.xlu0 %184
        %186 = vrot.lane.b32.xlu0 %v181, 127
        %v187 = vpop.permute.xlu0 %186
        %vm188 = vcmask 1039360
        %v189 = vsel %vm188, %v183, %v185
        %v190 = vsel %vm188, %v185, %v187
        %vm191 = vcmask 31744
        %v193 = vsel %vm191, %v173, 0
        %vm195 = vcmask 1043456
        %v196 = vsel %vm195, %v189, 0
        %v198 = vsel %vm195, %v190, 0
        %v200 = vsel %vm195, %v187, 0
        %202 = vmatpush.msra.mxu0 0.0
        %203 = vmatpush.msra.mxu0 0.0
        %204 = vmatpush.msra.mxu0 0.0
        %205 = vmatpush.msra.mxu0 0.0
        %206 = vmatpush.msra.mxu0 0.0
        %207 = vmatpush.msra.mxu0 0.0
        %208 = vmatpush.msra.mxu0 0.0
        %209 = vmatpush.msra.mxu0 0.0
        %210 = vmatpush.msra.mxu0 0.0
        %211 = vmatpush.msra.mxu0 0.0
        %212 = vmatpush.msra.mxu0 0.0
        %213 = vmatpush.msra.mxu0 0.0
        %214 = vmatpush.msra.mxu0 0.0
        %215 = vmatpush.msra.mxu0 0.0
        %216 = vmatpush.msra.mxu0 0.0
        %217 = vmatpush.msra.mxu0 %v196
        %218 = vmatmul.f32.gmra.mxu0 %v193
        %v219 = vpop.f32.mrf.mxu0
        %v220 = vadd.f32 0.0, %v219
        %221 = vdwg.mxu0
        %222 = vmatpush.msra.mxu0 0.0
        %223 = vmatpush.msra.mxu0 0.0
        %224 = vmatpush.msra.mxu0 0.0
        %225 = vmatpush.msra.mxu0 0.0
        %226 = vmatpush.msra.mxu0 0.0
        %227 = vmatpush.msra.mxu0 0.0
        %228 = vmatpush.msra.mxu0 0.0
        %229 = vmatpush.msra.mxu0 0.0
        %230 = vmatpush.msra.mxu0 0.0
        %231 = vmatpush.msra.mxu0 0.0
        %232 = vmatpush.msra.mxu0 0.0
        %233 = vmatpush.msra.mxu0 0.0
        %234 = vmatpush.msra.mxu0 0.0
        %235 = vmatpush.msra.mxu0 0.0
        %236 = vmatpush.msra.mxu0 0.0
        %237 = vmatpush.msra.mxu0 %v198
        %238 = vmatmul.f32.gmra.mxu0 %v193
        %v239 = vpop.f32.mrf.mxu0
        %v240 = vadd.f32 0.0, %v239
        %241 = vdwg.mxu0
        %242 = vmatpush.msra.mxu0 0.0
        %243 = vmatpush.msra.mxu0 0.0
        %244 = vmatpush.msra.mxu0 0.0
        %245 = vmatpush.msra.mxu0 0.0
        %246 = vmatpush.msra.mxu0 0.0
        %247 = vmatpush.msra.mxu0 0.0
        %248 = vmatpush.msra.mxu0 0.0
        %249 = vmatpush.msra.mxu0 0.0
        %250 = vmatpush.msra.mxu0 0.0
        %251 = vmatpush.msra.mxu0 0.0
        %252 = vmatpush.msra.mxu0 0.0
        %253 = vmatpush.msra.mxu0 0.0
        %254 = vmatpush.msra.mxu0 0.0
        %255 = vmatpush.msra.mxu0 0.0
        %256 = vmatpush.msra.mxu0 0.0
        %257 = vmatpush.msra.mxu0 %v200
        %258 = vmatmul.f32.gmra.mxu0 %v193
        %v259 = vpop.f32.mrf.mxu0
        %v260 = vadd.f32 0.0, %v259
        %261 = vdwg.mxu0
        %262 = vst [vmem:[#allocation1] ss:$2 sm:$0xff] %v169
        %s263 = scalar_lea.vmem [#allocation1], 16
        %264 = vst [vmem:[%s263] ss:$2 sm:$0xff] %v170
        %v265 = vld.sshfl [vmem:[#allocation1] sm:$0xff pattern:$0x75316420]
        %v266 = vld.sshfl [vmem:[#allocation1 + $0x8] sm:$0xff pattern:$0x75316420]
        %v267 = vld.sshfl [vmem:[#allocation1 + $0x10] sm:$0xff pattern:$0x75316420]
        %v269 = vsel %vm191, %v171, 0
        %v271 = vsel %vm195, %v265, 0
        %v273 = vsel %vm195, %v266, 0
        %v275 = vsel %vm195, %v267, 0
        %277 = vmatpush.msra.mxu0 0.0
        %278 = vmatpush.msra.mxu0 0.0
        %279 = vmatpush.msra.mxu0 0.0
        %280 = vmatpush.msra.mxu0 0.0
        %281 = vmatpush.msra.mxu0 0.0
        %282 = vmatpush.msra.mxu0 0.0
        %283 = vmatpush.msra.mxu0 0.0
        %284 = vmatpush.msra.mxu0 0.0
        %285 = vmatpush.msra.mxu0 0.0
        %286 = vmatpush.msra.mxu0 0.0
        %287 = vmatpush.msra.mxu0 0.0
        %288 = vmatpush.msra.mxu0 0.0
        %289 = vmatpush.msra.mxu0 0.0
        %290 = vmatpush.msra.mxu0 0.0
        %291 = vmatpush.msra.mxu0 0.0
        %292 = vmatpush.msra.mxu0 %v271
        %293 = vmatmul.f32.gmra.mxu0 %v269
        %v294 = vpop.f32.mrf.mxu0
        %v295 = vadd.f32 %v220, %v294
        %296 = vdwg.mxu0
        %297 = vmatpush.msra.mxu0 0.0
        %298 = vmatpush.msra.mxu0 0.0
        %299 = vmatpush.msra.mxu0 0.0
        %300 = vmatpush.msra.mxu0 0.0
        %301 = vmatpush.msra.mxu0 0.0
        %302 = vmatpush.msra.mxu0 0.0
        %303 = vmatpush.msra.mxu0 0.0
        %304 = vmatpush.msra.mxu0 0.0
        %305 = vmatpush.msra.mxu0 0.0
        %306 = vmatpush.msra.mxu0 0.0
        %307 = vmatpush.msra.mxu0 0.0
        %308 = vmatpush.msra.mxu0 0.0
        %309 = vmatpush.msra.mxu0 0.0
        %310 = vmatpush.msra.mxu0 0.0
        %311 = vmatpush.msra.mxu0 0.0
        %312 = vmatpush.msra.mxu0 %v273
        %313 = vmatmul.f32.gmra.mxu0 %v269
        %v314 = vpop.f32.mrf.mxu0
        %v315 = vadd.f32 %v240, %v314
        %316 = vdwg.mxu0
        %317 = vmatpush.msra.mxu0 0.0
        %318 = vmatpush.msra.mxu0 0.0
        %319 = vmatpush.msra.mxu0 0.0
        %320 = vmatpush.msra.mxu0 0.0
        %321 = vmatpush.msra.mxu0 0.0
        %322 = vmatpush.msra.mxu0 0.0
        %323 = vmatpush.msra.mxu0 0.0
        %324 = vmatpush.msra.mxu0 0.0
        %325 = vmatpush.msra.mxu0 0.0
        %326 = vmatpush.msra.mxu0 0.0
        %327 = vmatpush.msra.mxu0 0.0
        %328 = vmatpush.msra.mxu0 0.0
        %329 = vmatpush.msra.mxu0 0.0
        %330 = vmatpush.msra.mxu0 0.0
        %331 = vmatpush.msra.mxu0 0.0
        %332 = vmatpush.msra.mxu0 %v275
        %333 = vmatmul.f32.gmra.mxu0 %v269
        %v334 = vpop.f32.mrf.mxu0
        %v335 = vadd.f32 %v260, %v334
        %336 = vdwg.mxu0
        %s337 = scalar_lea.vmem %s1, 8
        %v338 = vld [vmem:[%s337] sm:$0xf]
        %339 = vst [vmem:[#allocation1] ss:$2 sm:$0xff] %v169
        %s340 = scalar_lea.vmem [#allocation1], 16
        %341 = vst [vmem:[%s340] ss:$2 sm:$0xff] %v170
        %v342 = vld.sshfl [vmem:[#allocation1] sm:$0xff pattern:$0x75316420]
        %v343 = vld.sshfl [vmem:[#allocation1 + $0x8] sm:$0xff pattern:$0x75316420]
        %v344 = vld.sshfl [vmem:[#allocation1 + $0x10] sm:$0xff pattern:$0x75316420]
        %345 = vrot.lane.b32.xlu0 %v342, 126
        %v346 = vpop.permute.xlu0 %345
        %347 = vrot.lane.b32.xlu0 %v343, 126
        %v348 = vpop.permute.xlu0 %347
        %349 = vrot.lane.b32.xlu0 %v344, 126
        %v350 = vpop.permute.xlu0 %349
        %vm351 = vcmask 1031168
        %v352 = vsel %vm351, %v346, %v348
        %v353 = vsel %vm351, %v348, %v350
        %v355 = vsel %vm191, %v338, 0
        %v357 = vsel %vm195, %v352, 0
        %v359 = vsel %vm195, %v353, 0
        %v361 = vsel %vm195, %v350, 0
        %363 = vmatpush.msra.mxu0 0.0
        %364 = vmatpush.msra.mxu0 0.0
        %365 = vmatpush.msra.mxu0 0.0
        %366 = vmatpush.msra.mxu0 0.0
        %367 = vmatpush.msra.mxu0 0.0
        %368 = vmatpush.msra.mxu0 0.0
        %369 = vmatpush.msra.mxu0 0.0
        %370 = vmatpush.msra.mxu0 0.0
        %371 = vmatpush.msra.mxu0 0.0
        %372 = vmatpush.msra.mxu0 0.0
        %373 = vmatpush.msra.mxu0 0.0
        %374 = vmatpush.msra.mxu0 0.0
        %375 = vmatpush.msra.mxu0 0.0
        %376 = vmatpush.msra.mxu0 0.0
        %377 = vmatpush.msra.mxu0 0.0
        %378 = vmatpush.msra.mxu0 %v357
        %379 = vmatmul.f32.gmra.mxu0 %v355
        %v380 = vpop.f32.mrf.mxu0
        %v381 = vadd.f32 0.0, %v380
        %382 = vdwg.mxu0
        %383 = vmatpush.msra.mxu0 0.0
        %384 = vmatpush.msra.mxu0 0.0
        %385 = vmatpush.msra.mxu0 0.0
        %386 = vmatpush.msra.mxu0 0.0
        %387 = vmatpush.msra.mxu0 0.0
        %388 = vmatpush.msra.mxu0 0.0
        %389 = vmatpush.msra.mxu0 0.0
        %390 = vmatpush.msra.mxu0 0.0
        %391 = vmatpush.msra.mxu0 0.0
        %392 = vmatpush.msra.mxu0 0.0
        %393 = vmatpush.msra.mxu0 0.0
        %394 = vmatpush.msra.mxu0 0.0
        %395 = vmatpush.msra.mxu0 0.0
        %396 = vmatpush.msra.mxu0 0.0
        %397 = vmatpush.msra.mxu0 0.0
        %398 = vmatpush.msra.mxu0 %v359
        %399 = vmatmul.f32.gmra.mxu0 %v355
        %v400 = vpop.f32.mrf.mxu0
        %v401 = vadd.f32 0.0, %v400
        %402 = vdwg.mxu0
        %403 = vmatpush.msra.mxu0 0.0
        %404 = vmatpush.msra.mxu0 0.0
        %405 = vmatpush.msra.mxu0 0.0
        %406 = vmatpush.msra.mxu0 0.0
        %407 = vmatpush.msra.mxu0 0.0
        %408 = vmatpush.msra.mxu0 0.0
        %409 = vmatpush.msra.mxu0 0.0
        %410 = vmatpush.msra.mxu0 0.0
        %411 = vmatpush.msra.mxu0 0.0
        %412 = vmatpush.msra.mxu0 0.0
        %413 = vmatpush.msra.mxu0 0.0
        %414 = vmatpush.msra.mxu0 0.0
        %415 = vmatpush.msra.mxu0 0.0
        %416 = vmatpush.msra.mxu0 0.0
        %417 = vmatpush.msra.mxu0 0.0
        %418 = vmatpush.msra.mxu0 %v361
        %419 = vmatmul.f32.gmra.mxu0 %v355
        %v420 = vpop.f32.mrf.mxu0
        %v421 = vadd.f32 0.0, %v420
        %422 = vdwg.mxu0
        %v423 = vadd.f32 %v295, %v381
        %v424 = vadd.f32 %v315, %v401
        %v425 = vadd.f32 %v335, %v421
        %s426 = scalar_lea.vmem %s1, 12
        %v427 = vld [vmem:[%s426] sm:$0xf]
        %428 = vst [vmem:[#allocation1] ss:$2 sm:$0xff] %v169
        %s429 = scalar_lea.vmem [#allocation1], 16
        %430 = vst [vmem:[%s429] ss:$2 sm:$0xff] %v170
        %v431 = vld.sshfl [vmem:[#allocation1] sm:$0xff pattern:$0x75316420]
        %v432 = vld.sshfl [vmem:[#allocation1 + $0x8] sm:$0xff pattern:$0x75316420]
        %v433 = vld.sshfl [vmem:[#allocation1 + $0x10] sm:$0xff pattern:$0x75316420]
        %434 = vrot.lane.b32.xlu0 %v431, 110
        %v435 = vpop.permute.xlu0 %434
        %436 = vrot.lane.b32.xlu0 %v432, 110
        %v437 = vpop.permute.xlu0 %436
        %438 = vrot.lane.b32.xlu0 %v433, 110
        %v439 = vpop.permute.xlu0 %438
        %vm440 = vcmask 900096
        %v441 = vsel %vm440, %v435, %v437
        %v442 = vsel %vm440, %v437, %v439
        %v444 = vsel %vm191, %v427, 0
        %v446 = vsel %vm195, %v441, 0
        %v448 = vsel %vm195, %v442, 0
        %v450 = vsel %vm195, %v439, 0
        %452 = vmatpush.msra.mxu0 0.0
        %453 = vmatpush.msra.mxu0 0.0
        %454 = vmatpush.msra.mxu0 0.0
        %455 = vmatpush.msra.mxu0 0.0
        %456 = vmatpush.msra.mxu0 0.0
        %457 = vmatpush.msra.mxu0 0.0
        %458 = vmatpush.msra.mxu0 0.0
        %459 = vmatpush.msra.mxu0 0.0
        %460 = vmatpush.msra.mxu0 0.0
        %461 = vmatpush.msra.mxu0 0.0
        %462 = vmatpush.msra.mxu0 0.0
        %463 = vmatpush.msra.mxu0 0.0
        %464 = vmatpush.msra.mxu0 0.0
        %465 = vmatpush.msra.mxu0 0.0
        %466 = vmatpush.msra.mxu0 0.0
        %467 = vmatpush.msra.mxu0 %v446
        %468 = vmatmul.f32.gmra.mxu0 %v444
        %v469 = vpop.f32.mrf.mxu0
        %v470 = vadd.f32 0.0, %v469
        %471 = vdwg.mxu0
        %472 = vmatpush.msra.mxu0 0.0
        %473 = vmatpush.msra.mxu0 0.0
        %474 = vmatpush.msra.mxu0 0.0
        %475 = vmatpush.msra.mxu0 0.0
        %476 = vmatpush.msra.mxu0 0.0
        %477 = vmatpush.msra.mxu0 0.0
        %478 = vmatpush.msra.mxu0 0.0
        %479 = vmatpush.msra.mxu0 0.0
        %480 = vmatpush.msra.mxu0 0.0
        %481 = vmatpush.msra.mxu0 0.0
        %482 = vmatpush.msra.mxu0 0.0
        %483 = vmatpush.msra.mxu0 0.0
        %484 = vmatpush.msra.mxu0 0.0
        %485 = vmatpush.msra.mxu0 0.0
        %486 = vmatpush.msra.mxu0 0.0
        %487 = vmatpush.msra.mxu0 %v448
        %488 = vmatmul.f32.gmra.mxu0 %v444
        %v489 = vpop.f32.mrf.mxu0
        %v490 = vadd.f32 0.0, %v489
        %491 = vdwg.mxu0
        %492 = vmatpush.msra.mxu0 0.0
        %493 = vmatpush.msra.mxu0 0.0
        %494 = vmatpush.msra.mxu0 0.0
        %495 = vmatpush.msra.mxu0 0.0
        %496 = vmatpush.msra.mxu0 0.0
        %497 = vmatpush.msra.mxu0 0.0
        %498 = vmatpush.msra.mxu0 0.0
        %499 = vmatpush.msra.mxu0 0.0
        %500 = vmatpush.msra.mxu0 0.0
        %501 = vmatpush.msra.mxu0 0.0
        %502 = vmatpush.msra.mxu0 0.0
        %503 = vmatpush.msra.mxu0 0.0
        %504 = vmatpush.msra.mxu0 0.0
        %505 = vmatpush.msra.mxu0 0.0
        %506 = vmatpush.msra.mxu0 0.0
        %507 = vmatpush.msra.mxu0 %v450
        %508 = vmatmul.f32.gmra.mxu0 %v444
        %v509 = vpop.f32.mrf.mxu0
        %v510 = vadd.f32 0.0, %v509
        %511 = vdwg.mxu0
        %v512 = vadd.f32 %v423, %v470
        %v513 = vadd.f32 %v424, %v490
        %v514 = vadd.f32 %v425, %v510
        %s515 = scalar_lea.vmem %s1, 16
        %v516 = vld [vmem:[%s515] sm:$0xf]
        %517 = vst [vmem:[#allocation1] ss:$2 sm:$0xff] %v169
        %s518 = scalar_lea.vmem [#allocation1], 16
        %519 = vst [vmem:[%s518] ss:$2 sm:$0xff] %v170
        %v520 = vld.sshfl [vmem:[#allocation1] sm:$0xff pattern:$0x75316420]
        %v521 = vld.sshfl [vmem:[#allocation1 + $0x8] sm:$0xff pattern:$0x75316420]
        %v522 = vld.sshfl [vmem:[#allocation1 + $0x10] sm:$0xff pattern:$0x75316420]
        %523 = vrot.lane.b32.xlu0 %v520, 109
        %v524 = vpop.permute.xlu0 %523
        %525 = vrot.lane.b32.xlu0 %v521, 109
        %v526 = vpop.permute.xlu0 %525
        %527 = vrot.lane.b32.xlu0 %v522, 109
        %v528 = vpop.permute.xlu0 %527
        %vm529 = vcmask 891904
        %v530 = vsel %vm529, %v524, %v526
        %v531 = vsel %vm529, %v526, %v528
        %v533 = vsel %vm191, %v516, 0
        %v535 = vsel %vm195, %v530, 0
        %v537 = vsel %vm195, %v531, 0
        %v539 = vsel %vm195, %v528, 0
        %541 = vmatpush.msra.mxu0 0.0
        %542 = vmatpush.msra.mxu0 0.0
        %543 = vmatpush.msra.mxu0 0.0
        %544 = vmatpush.msra.mxu0 0.0
        %545 = vmatpush.msra.mxu0 0.0
        %546 = vmatpush.msra.mxu0 0.0
        %547 = vmatpush.msra.mxu0 0.0
        %548 = vmatpush.msra.mxu0 0.0
        %549 = vmatpush.msra.mxu0 0.0
        %550 = vmatpush.msra.mxu0 0.0
        %551 = vmatpush.msra.mxu0 0.0
        %552 = vmatpush.msra.mxu0 0.0
        %553 = vmatpush.msra.mxu0 0.0
        %554 = vmatpush.msra.mxu0 0.0
        %555 = vmatpush.msra.mxu0 0.0
        %556 = vmatpush.msra.mxu0 %v535
        %557 = vmatmul.f32.gmra.mxu0 %v533
        %v558 = vpop.f32.mrf.mxu0
        %v559 = vadd.f32 0.0, %v558
        %560 = vdwg.mxu0
        %561 = vmatpush.msra.mxu0 0.0
        %562 = vmatpush.msra.mxu0 0.0
        %563 = vmatpush.msra.mxu0 0.0
        %564 = vmatpush.msra.mxu0 0.0
        %565 = vmatpush.msra.mxu0 0.0
        %566 = vmatpush.msra.mxu0 0.0
        %567 = vmatpush.msra.mxu0 0.0
        %568 = vmatpush.msra.mxu0 0.0
        %569 = vmatpush.msra.mxu0 0.0
        %570 = vmatpush.msra.mxu0 0.0
        %571 = vmatpush.msra.mxu0 0.0
        %572 = vmatpush.msra.mxu0 0.0
        %573 = vmatpush.msra.mxu0 0.0
        %574 = vmatpush.msra.mxu0 0.0
        %575 = vmatpush.msra.mxu0 0.0
        %576 = vmatpush.msra.mxu0 %v537
        %577 = vmatmul.f32.gmra.mxu0 %v533
        %v578 = vpop.f32.mrf.mxu0
        %v579 = vadd.f32 0.0, %v578
        %580 = vdwg.mxu0
        %581 = vmatpush.msra.mxu0 0.0
        %582 = vmatpush.msra.mxu0 0.0
        %583 = vmatpush.msra.mxu0 0.0
        %584 = vmatpush.msra.mxu0 0.0
        %585 = vmatpush.msra.mxu0 0.0
        %586 = vmatpush.msra.mxu0 0.0
        %587 = vmatpush.msra.mxu0 0.0
        %588 = vmatpush.msra.mxu0 0.0
        %589 = vmatpush.msra.mxu0 0.0
        %590 = vmatpush.msra.mxu0 0.0
        %591 = vmatpush.msra.mxu0 0.0
        %592 = vmatpush.msra.mxu0 0.0
        %593 = vmatpush.msra.mxu0 0.0
        %594 = vmatpush.msra.mxu0 0.0
        %595 = vmatpush.msra.mxu0 0.0
        %596 = vmatpush.msra.mxu0 %v539
        %597 = vmatmul.f32.gmra.mxu0 %v533
        %v598 = vpop.f32.mrf.mxu0
        %v599 = vadd.f32 0.0, %v598
        %600 = vdwg.mxu0
        %v601 = vadd.f32 %v512, %v559
        %v602 = vadd.f32 %v513, %v579
        %v603 = vadd.f32 %v514, %v599
        %s604 = scalar_lea.vmem %s1, 20
        %v605 = vld [vmem:[%s604] sm:$0xf]
        %606 = vst [vmem:[#allocation1] ss:$2 sm:$0xff] %v169
        %s607 = scalar_lea.vmem [#allocation1], 16
        %608 = vst [vmem:[%s607] ss:$2 sm:$0xff] %v170
        %v609 = vld.sshfl [vmem:[#allocation1] sm:$0xff pattern:$0x75316420]
        %v610 = vld.sshfl [vmem:[#allocation1 + $0x8] sm:$0xff pattern:$0x75316420]
        %v611 = vld.sshfl [vmem:[#allocation1 + $0x10] sm:$0xff pattern:$0x75316420]
        %612 = vrot.lane.b32.xlu0 %v609, 108
        %v613 = vpop.permute.xlu0 %612
        %614 = vrot.lane.b32.xlu0 %v610, 108
        %v615 = vpop.permute.xlu0 %614
        %616 = vrot.lane.b32.xlu0 %v611, 108
        %v617 = vpop.permute.xlu0 %616
        %vm618 = vcmask 883712
        %v619 = vsel %vm618, %v613, %v615
        %v620 = vsel %vm618, %v615, %v617
        %v622 = vsel %vm191, %v605, 0
        %v624 = vsel %vm195, %v619, 0
        %v626 = vsel %vm195, %v620, 0
        %v628 = vsel %vm195, %v617, 0
        %630 = vmatpush.msra.mxu0 0.0
        %631 = vmatpush.msra.mxu0 0.0
        %632 = vmatpush.msra.mxu0 0.0
        %633 = vmatpush.msra.mxu0 0.0
        %634 = vmatpush.msra.mxu0 0.0
        %635 = vmatpush.msra.mxu0 0.0
        %636 = vmatpush.msra.mxu0 0.0
        %637 = vmatpush.msra.mxu0 0.0
        %638 = vmatpush.msra.mxu0 0.0
        %639 = vmatpush.msra.mxu0 0.0
        %640 = vmatpush.msra.mxu0 0.0
        %641 = vmatpush.msra.mxu0 0.0
        %642 = vmatpush.msra.mxu0 0.0
        %643 = vmatpush.msra.mxu0 0.0
        %644 = vmatpush.msra.mxu0 0.0
        %645 = vmatpush.msra.mxu0 %v624
        %646 = vmatmul.f32.gmra.mxu0 %v622
        %v647 = vpop.f32.mrf.mxu0
        %v648 = vadd.f32 0.0, %v647
        %649 = vdwg.mxu0
        %650 = vmatpush.msra.mxu0 0.0
        %651 = vmatpush.msra.mxu0 0.0
        %652 = vmatpush.msra.mxu0 0.0
        %653 = vmatpush.msra.mxu0 0.0
        %654 = vmatpush.msra.mxu0 0.0
        %655 = vmatpush.msra.mxu0 0.0
        %656 = vmatpush.msra.mxu0 0.0
        %657 = vmatpush.msra.mxu0 0.0
        %658 = vmatpush.msra.mxu0 0.0
        %659 = vmatpush.msra.mxu0 0.0
        %660 = vmatpush.msra.mxu0 0.0
        %661 = vmatpush.msra.mxu0 0.0
        %662 = vmatpush.msra.mxu0 0.0
        %663 = vmatpush.msra.mxu0 0.0
        %664 = vmatpush.msra.mxu0 0.0
        %665 = vmatpush.msra.mxu0 %v626
        %666 = vmatmul.f32.gmra.mxu0 %v622
        %v667 = vpop.f32.mrf.mxu0
        %v668 = vadd.f32 0.0, %v667
        %669 = vdwg.mxu0
        %670 = vmatpush.msra.mxu0 0.0
        %671 = vmatpush.msra.mxu0 0.0
        %672 = vmatpush.msra.mxu0 0.0
        %673 = vmatpush.msra.mxu0 0.0
        %674 = vmatpush.msra.mxu0 0.0
        %675 = vmatpush.msra.mxu0 0.0
        %676 = vmatpush.msra.mxu0 0.0
        %677 = vmatpush.msra.mxu0 0.0
        %678 = vmatpush.msra.mxu0 0.0
        %679 = vmatpush.msra.mxu0 0.0
        %680 = vmatpush.msra.mxu0 0.0
        %681 = vmatpush.msra.mxu0 0.0
        %682 = vmatpush.msra.mxu0 0.0
        %683 = vmatpush.msra.mxu0 0.0
        %684 = vmatpush.msra.mxu0 0.0
        %685 = vmatpush.msra.mxu0 %v628
        %686 = vmatmul.f32.gmra.mxu0 %v622
        %v687 = vpop.f32.mrf.mxu0
        %v688 = vadd.f32 0.0, %v687
        %689 = vdwg.mxu0
        %v690 = vadd.f32 %v601, %v648
        %v691 = vadd.f32 %v602, %v668
        %v692 = vadd.f32 %v603, %v688
        %s693 = scalar_lea.vmem %s1, 24
        %v694 = vld [vmem:[%s693] sm:$0xf]
        %695 = vst [vmem:[#allocation1] ss:$2 sm:$0xff] %v169
        %s696 = scalar_lea.vmem [#allocation1], 16
        %697 = vst [vmem:[%s696] ss:$2 sm:$0xff] %v170
        %v698 = vld.sshfl [vmem:[#allocation1] sm:$0xff pattern:$0x75316420]
        %v699 = vld.sshfl [vmem:[#allocation1 + $0x8] sm:$0xff pattern:$0x75316420]
        %v700 = vld.sshfl [vmem:[#allocation1 + $0x10] sm:$0xff pattern:$0x75316420]
        %701 = vrot.lane.b32.xlu0 %v698, 92
        %v702 = vpop.permute.xlu0 %701
        %703 = vrot.lane.b32.xlu0 %v699, 92
        %v704 = vpop.permute.xlu0 %703
        %705 = vrot.lane.b32.xlu0 %v700, 92
        %v706 = vpop.permute.xlu0 %705
        %vm707 = vcmask 752640
        %v708 = vsel %vm707, %v702, %v704
        %v709 = vsel %vm707, %v704, %v706
        %v711 = vsel %vm191, %v694, 0
        %v713 = vsel %vm195, %v708, 0
        %v715 = vsel %vm195, %v709, 0
        %v717 = vsel %vm195, %v706, 0
        %719 = vmatpush.msra.mxu0 0.0
        %720 = vmatpush.msra.mxu0 0.0
        %721 = vmatpush.msra.mxu0 0.0
        %722 = vmatpush.msra.mxu0 0.0
        %723 = vmatpush.msra.mxu0 0.0
        %724 = vmatpush.msra.mxu0 0.0
        %725 = vmatpush.msra.mxu0 0.0
        %726 = vmatpush.msra.mxu0 0.0
        %727 = vmatpush.msra.mxu0 0.0
        %728 = vmatpush.msra.mxu0 0.0
        %729 = vmatpush.msra.mxu0 0.0
        %730 = vmatpush.msra.mxu0 0.0
        %731 = vmatpush.msra.mxu0 0.0
        %732 = vmatpush.msra.mxu0 0.0
        %733 = vmatpush.msra.mxu0 0.0
        %734 = vmatpush.msra.mxu0 %v713
        %735 = vmatmul.f32.gmra.mxu0 %v711
        %v736 = vpop.f32.mrf.mxu0
        %v737 = vadd.f32 0.0, %v736
        %738 = vdwg.mxu0
        %739 = vmatpush.msra.mxu0 0.0
        %740 = vmatpush.msra.mxu0 0.0
        %741 = vmatpush.msra.mxu0 0.0
        %742 = vmatpush.msra.mxu0 0.0
        %743 = vmatpush.msra.mxu0 0.0
        %744 = vmatpush.msra.mxu0 0.0
        %745 = vmatpush.msra.mxu0 0.0
        %746 = vmatpush.msra.mxu0 0.0
        %747 = vmatpush.msra.mxu0 0.0
        %748 = vmatpush.msra.mxu0 0.0
        %749 = vmatpush.msra.mxu0 0.0
        %750 = vmatpush.msra.mxu0 0.0
        %751 = vmatpush.msra.mxu0 0.0
        %752 = vmatpush.msra.mxu0 0.0
        %753 = vmatpush.msra.mxu0 0.0
        %754 = vmatpush.msra.mxu0 %v715
        %755 = vmatmul.f32.gmra.mxu0 %v711
        %v756 = vpop.f32.mrf.mxu0
        %v757 = vadd.f32 0.0, %v756
        %758 = vdwg.mxu0
        %759 = vmatpush.msra.mxu0 0.0
        %760 = vmatpush.msra.mxu0 0.0
        %761 = vmatpush.msra.mxu0 0.0
        %762 = vmatpush.msra.mxu0 0.0
        %763 = vmatpush.msra.mxu0 0.0
        %764 = vmatpush.msra.mxu0 0.0
        %765 = vmatpush.msra.mxu0 0.0
        %766 = vmatpush.msra.mxu0 0.0
        %767 = vmatpush.msra.mxu0 0.0
        %768 = vmatpush.msra.mxu0 0.0
        %769 = vmatpush.msra.mxu0 0.0
        %770 = vmatpush.msra.mxu0 0.0
        %771 = vmatpush.msra.mxu0 0.0
        %772 = vmatpush.msra.mxu0 0.0
        %773 = vmatpush.msra.mxu0 0.0
        %774 = vmatpush.msra.mxu0 %v717
        %775 = vmatmul.f32.gmra.mxu0 %v711
        %v776 = vpop.f32.mrf.mxu0
        %v777 = vadd.f32 0.0, %v776
        %778 = vdwg.mxu0
        %v779 = vadd.f32 %v690, %v737
        %v780 = vadd.f32 %v691, %v757
        %v781 = vadd.f32 %v692, %v777
        %s782 = scalar_lea.vmem %s1, 28
        %v783 = vld [vmem:[%s782] sm:$0xf]
        %784 = vst [vmem:[#allocation1] ss:$2 sm:$0xff] %v169
        %s785 = scalar_lea.vmem [#allocation1], 16
        %786 = vst [vmem:[%s785] ss:$2 sm:$0xff] %v170
        %v787 = vld.sshfl [vmem:[#allocation1] sm:$0xff pattern:$0x75316420]
        %v788 = vld.sshfl [vmem:[#allocation1 + $0x8] sm:$0xff pattern:$0x75316420]
        %v789 = vld.sshfl [vmem:[#allocation1 + $0x10] sm:$0xff pattern:$0x75316420]
        %790 = vrot.lane.b32.xlu0 %v787, 91
        %v791 = vpop.permute.xlu0 %790
        %792 = vrot.lane.b32.xlu0 %v788, 91
        %v793 = vpop.permute.xlu0 %792
        %794 = vrot.lane.b32.xlu0 %v789, 91
        %v795 = vpop.permute.xlu0 %794
        %vm796 = vcmask 744448
        %v797 = vsel %vm796, %v791, %v793
        %v798 = vsel %vm796, %v793, %v795
        %v800 = vsel %vm191, %v783, 0
        %v802 = vsel %vm195, %v797, 0
        %v804 = vsel %vm195, %v798, 0
        %v806 = vsel %vm195, %v795, 0
        %808 = vmatpush.msra.mxu0 0.0
        %809 = vmatpush.msra.mxu0 0.0
        %810 = vmatpush.msra.mxu0 0.0
        %811 = vmatpush.msra.mxu0 0.0
        %812 = vmatpush.msra.mxu0 0.0
        %813 = vmatpush.msra.mxu0 0.0
        %814 = vmatpush.msra.mxu0 0.0
        %815 = vmatpush.msra.mxu0 0.0
        %816 = vmatpush.msra.mxu0 0.0
        %817 = vmatpush.msra.mxu0 0.0
        %818 = vmatpush.msra.mxu0 0.0
        %819 = vmatpush.msra.mxu0 0.0
        %820 = vmatpush.msra.mxu0 0.0
        %821 = vmatpush.msra.mxu0 0.0
        %822 = vmatpush.msra.mxu0 0.0
        %823 = vmatpush.msra.mxu0 %v802
        %824 = vmatmul.f32.gmra.mxu0 %v800
        %v825 = vpop.f32.mrf.mxu0
        %v826 = vadd.f32 0.0, %v825
        %827 = vdwg.mxu0
        %828 = vmatpush.msra.mxu0 0.0
        %829 = vmatpush.msra.mxu0 0.0
        %830 = vmatpush.msra.mxu0 0.0
        %831 = vmatpush.msra.mxu0 0.0
        %832 = vmatpush.msra.mxu0 0.0
        %833 = vmatpush.msra.mxu0 0.0
        %834 = vmatpush.msra.mxu0 0.0
        %835 = vmatpush.msra.mxu0 0.0
        %836 = vmatpush.msra.mxu0 0.0
        %837 = vmatpush.msra.mxu0 0.0
        %838 = vmatpush.msra.mxu0 0.0
        %839 = vmatpush.msra.mxu0 0.0
        %840 = vmatpush.msra.mxu0 0.0
        %841 = vmatpush.msra.mxu0 0.0
        %842 = vmatpush.msra.mxu0 0.0
        %843 = vmatpush.msra.mxu0 %v804
        %844 = vmatmul.f32.gmra.mxu0 %v800
        %v845 = vpop.f32.mrf.mxu0
        %v846 = vadd.f32 0.0, %v845
        %847 = vdwg.mxu0
        %848 = vmatpush.msra.mxu0 0.0
        %849 = vmatpush.msra.mxu0 0.0
        %850 = vmatpush.msra.mxu0 0.0
        %851 = vmatpush.msra.mxu0 0.0
        %852 = vmatpush.msra.mxu0 0.0
        %853 = vmatpush.msra.mxu0 0.0
        %854 = vmatpush.msra.mxu0 0.0
        %855 = vmatpush.msra.mxu0 0.0
        %856 = vmatpush.msra.mxu0 0.0
        %857 = vmatpush.msra.mxu0 0.0
        %858 = vmatpush.msra.mxu0 0.0
        %859 = vmatpush.msra.mxu0 0.0
        %860 = vmatpush.msra.mxu0 0.0
        %861 = vmatpush.msra.mxu0 0.0
        %862 = vmatpush.msra.mxu0 0.0
        %863 = vmatpush.msra.mxu0 %v806
        %864 = vmatmul.f32.gmra.mxu0 %v800
        %v865 = vpop.f32.mrf.mxu0
        %v866 = vadd.f32 0.0, %v865
        %867 = vdwg.mxu0
        %v868 = vadd.f32 %v779, %v826
        %v869 = vadd.f32 %v780, %v846
        %v870 = vadd.f32 %v781, %v866
        %s871 = scalar_lea.vmem %s1, 32
        %v872 = vld [vmem:[%s871] sm:$0xf]
        %873 = vst [vmem:[#allocation1] ss:$2 sm:$0xff] %v169
        %s874 = scalar_lea.vmem [#allocation1], 16
        %875 = vst [vmem:[%s874] ss:$2 sm:$0xff] %v170
        %v876 = vld.sshfl [vmem:[#allocation1] sm:$0xff pattern:$0x75316420]
        %v877 = vld.sshfl [vmem:[#allocation1 + $0x8] sm:$0xff pattern:$0x75316420]
        %v878 = vld.sshfl [vmem:[#allocation1 + $0x10] sm:$0xff pattern:$0x75316420]
        %879 = vrot.lane.b32.xlu0 %v876, 90
        %v880 = vpop.permute.xlu0 %879
        %881 = vrot.lane.b32.xlu0 %v877, 90
        %v882 = vpop.permute.xlu0 %881
        %883 = vrot.lane.b32.xlu0 %v878, 90
        %v884 = vpop.permute.xlu0 %883
        %vm885 = vcmask 736256
        %v886 = vsel %vm885, %v880, %v882
        %v887 = vsel %vm885, %v882, %v884
        %v889 = vsel %vm191, %v872, 0
        %v891 = vsel %vm195, %v886, 0
        %v893 = vsel %vm195, %v887, 0
        %v895 = vsel %vm195, %v884, 0
        %897 = vmatpush.msra.mxu0 0.0
        %898 = vmatpush.msra.mxu0 0.0
        %899 = vmatpush.msra.mxu0 0.0
        %900 = vmatpush.msra.mxu0 0.0
        %901 = vmatpush.msra.mxu0 0.0
        %902 = vmatpush.msra.mxu0 0.0
        %903 = vmatpush.msra.mxu0 0.0
        %904 = vmatpush.msra.mxu0 0.0
        %905 = vmatpush.msra.mxu0 0.0
        %906 = vmatpush.msra.mxu0 0.0
        %907 = vmatpush.msra.mxu0 0.0
        %908 = vmatpush.msra.mxu0 0.0
        %909 = vmatpush.msra.mxu0 0.0
        %910 = vmatpush.msra.mxu0 0.0
        %911 = vmatpush.msra.mxu0 0.0
        %912 = vmatpush.msra.mxu0 %v891
        %913 = vmatmul.f32.gmra.mxu0 %v889
        %v914 = vpop.f32.mrf.mxu0
        %v915 = vadd.f32 0.0, %v914
        %916 = vdwg.mxu0
        %917 = vmatpush.msra.mxu0 0.0
        %918 = vmatpush.msra.mxu0 0.0
        %919 = vmatpush.msra.mxu0 0.0
        %920 = vmatpush.msra.mxu0 0.0
        %921 = vmatpush.msra.mxu0 0.0
        %922 = vmatpush.msra.mxu0 0.0
        %923 = vmatpush.msra.mxu0 0.0
        %924 = vmatpush.msra.mxu0 0.0
        %925 = vmatpush.msra.mxu0 0.0
        %926 = vmatpush.msra.mxu0 0.0
        %927 = vmatpush.msra.mxu0 0.0
        %928 = vmatpush.msra.mxu0 0.0
        %929 = vmatpush.msra.mxu0 0.0
        %930 = vmatpush.msra.mxu0 0.0
        %931 = vmatpush.msra.mxu0 0.0
        %932 = vmatpush.msra.mxu0 %v893
        %933 = vmatmul.f32.gmra.mxu0 %v889
        %v934 = vpop.f32.mrf.mxu0
        %v935 = vadd.f32 0.0, %v934
        %936 = vdwg.mxu0
        %937 = vmatpush.msra.mxu0 0.0
        %938 = vmatpush.msra.mxu0 0.0
        %939 = vmatpush.msra.mxu0 0.0
        %940 = vmatpush.msra.mxu0 0.0
        %941 = vmatpush.msra.mxu0 0.0
        %942 = vmatpush.msra.mxu0 0.0
        %943 = vmatpush.msra.mxu0 0.0
        %944 = vmatpush.msra.mxu0 0.0
        %945 = vmatpush.msra.mxu0 0.0
        %946 = vmatpush.msra.mxu0 0.0
        %947 = vmatpush.msra.mxu0 0.0
        %948 = vmatpush.msra.mxu0 0.0
        %949 = vmatpush.msra.mxu0 0.0
        %950 = vmatpush.msra.mxu0 0.0
        %951 = vmatpush.msra.mxu0 0.0
        %952 = vmatpush.msra.mxu0 %v895
        %953 = vmatmul.f32.gmra.mxu0 %v889
        %v954 = vpop.f32.mrf.mxu0
        %v955 = vadd.f32 0.0, %v954
        %956 = vdwg.mxu0
        %v957 = vadd.f32 %v868, %v915
        %v958 = vadd.f32 %v869, %v935
        %v959 = vadd.f32 %v870, %v955
        %v960 = vld [vmem:[%s2] sm:$0xf]
        %962 = vset.pattern.permute.xlu0 0
        %963 = vperm.xlu0 %962, %v960
        %v964 = vpop.permute.xlu0 %963
        %v966 = vadd.f32 %v957, %v964
        %v967 = vadd.f32 %v958, %v964
        %v968 = vadd.f32 %v959, %v964
        %vm969 = vcmp.ge.f32.partialorder %v966, 0.0
        %vm970 = vcmp.ge.f32.partialorder %v967, 0.0
        %vm971 = vcmp.ge.f32.partialorder %v968, 0.0
        %v972 = vmul.f32 %v966, 0.1
        %v973 = vmul.f32 %v967, 0.1
        %v974 = vmul.f32 %v968, 0.1
        %v975 = vsel %vm969, %v966, %v972
        %v976 = vsel %vm970, %v967, %v973
        %v977 = vsel %vm971, %v968, %v974
        %v980 = vrot.slane %v976, 4
        %v981 = vsel %vm195, %v975, %v980
        %983 = vst [vmem:[%s163] sm:$0xff] %v981
        %vm984 = vcmask 257024
        %985 = vst.msk [vmem:[%s163 + $0x8] sm:$0xf] %vm984, %v977
        %s986 = sand.u32 %s93, 1
        %s987 = scalar_lea.sflag [#allocation3], %s986
        %s988 = sand.u32 %s93, 1
        %s989 = smul.addr %s988, 12
        %s990 = scalar_lea.vmem [#allocation2], %s989
        // Predicated region
        $region33: #{tpu_custom_call.1} parent=31 // pred_check
          %p991 = pneg %p103
        $region34: #{tpu_custom_call.1} parent=31 // pred_check_branch
          %993 = sbr.rel (%p991) target = $region36
        $region35: #{tpu_custom_call.1} parent=31 // pred_region
          %995 = vsyncadd %s987, 0
          %s996 = smul.addr %s17, 3
          %s997 = smul.addr %s996, 4
          %s998 = scalar_lea.hbm %s3, %s997
          %s1000 = sshll.u32 %s990, 4
          %s1001 = int_to_ptr.vmem [resolvable:$true] %s1000
          %s1002 = sshll.u32 %s998, 4
          %s1003 = int_to_ptr.hbm [resolvable:$true] %s1002
          %1005 = dma.vmem_to_hbm [thread:$0]  %s1001, 192, %s1003, %s987
        $region36: #{tpu_custom_call.1} parent=31 // pred_fallthru
          _
      $region32: #{tpu_custom_call.1} parent=5 // pred_fallthru
        _
      %p1006 = scmp.le.s32.totalorder 2, %s12
      // Predicated region
      $region37: #{tpu_custom_call.1} parent=5 // pred_check
        %p1007 = pneg %p1006
      $region38: #{tpu_custom_call.1} parent=5 // pred_check_branch
        %1009 = sbr.rel (%p1007) target = $region40
      $region39: #{tpu_custom_call.1} parent=5 // pred_region
        %s1010 = ssub.s32 %s12, 2
        // Predicated region
        $region41: #{tpu_custom_call.1} parent=39 // pred_check
          %p1011 = pneg %p109
        $region42: #{tpu_custom_call.1} parent=39 // pred_check_branch
          %1013 = sbr.rel (%p1011) target = $region44
        $region43: #{tpu_custom_call.1} parent=39 // pred_region
          %s1014 = sand.u32 %s94, 1
          %s1015 = scalar_lea.sflag [#allocation3], %s1014
          %s1016 = sand.u32 %s94, 1
          %s1017 = smul.addr %s1016, 12
          %s1018 = scalar_lea.vmem [#allocation2], %s1017
          %1020 = dma.done %s1015, 192
        $region44: #{tpu_custom_call.1} parent=39 // pred_fallthru
          _
      $region40: #{tpu_custom_call.1} parent=5 // pred_fallthru
        _
    $region6: #{tpu_custom_call.1} parent=1 // loop_footer
      %s16 = sadd.s32 1, %s12
    $region7: #{tpu_custom_call.1} parent=1 // loop_footer_branch
      %11 = sbr.rel target = $region3
    $region8: #{tpu_custom_call.1} parent=1 // loop_exit
      _
    %1021 = vsyncpa [#allocation3], 1
    %s1022 = scalar_lea.sflag [#allocation3], 1
    %1023 = vsyncpa %s1022, 1

</llo_original>
